<compile_context>
chip_gen: v5e
topology: v5e:2x2
jax: 0.10.0
libtpu: 0.0.40
codegen_flags: <defaults>
</compile_context>

<pallas_src>
import math

import jax
import jax.numpy as jnp
from jax.experimental import pallas as pl
from jax.experimental.pallas import tpu as pltpu


def _round_up(a: int, b: int) -> int:
    return ((a + b - 1) // b) * b


def _default_tile_targets():
    """Chip-aware (node-tile, K-tile) targets. v7x: 64 MiB VMEM/TC, 2 TCs."""
    try:
        kind = jax.devices()[0].device_kind.lower()
    except Exception:  # defensive: fall back to conservative tiles
        kind = ""
    if "v7" in kind:
        return 256, 512        # keep double-buffered residency well under 64 MiB
    return 512, 1024           # v5e / v6e: 128 MiB VMEM, bigger tiles amortize step cost


# --------------------------------------------------------------------------- #
# Pallas kernel: K-tiled MXU matmul   out_cat = adj_cat @ b                    #
#   adj_cat : (N_p, R*N_p)   column block k = adj[..., k]                      #
#   b       : (R*N_p, R*F_out_p)  circulant-permuted x@W products (precomputed)#
#   out_cat : (N_p, R*F_out_p)    column block i = out[..., i]  (lane-dense)   #
# --------------------------------------------------------------------------- #
def _atgco_matmul_kernel(adj_ref, b_ref, out_ref, acc_ref):
    k_step = pl.program_id(1)          # contraction (K) axis, innermost

    @pl.when(k_step == 0)
    def _init():
        acc_ref[...] = jnp.zeros_like(acc_ref)

    acc_ref[...] += jnp.dot(adj_ref[...], b_ref[...],
                            preferred_element_type=jnp.float32)

    @pl.when(k_step == pl.num_programs(1) - 1)
    def _finalize():
        out_ref[...] = acc_ref[...].astype(out_ref.dtype)


def atgco_v1_forward(x, adj, weight, *, compute_dtype=jnp.bfloat16,
                     tm_target=None, tk_target=None):
    """ATGCO_V1.forward (bias=False).

    x: (N, F_in, R), adj: (N, N, R), weight: (F_in, F_out, R) -> (N, F_out, R).
    compute_dtype: dtype fed to the MXU (bf16 recommended); accumulation is f32.
    """
    N, F_in, R = x.shape
    F_out = weight.shape[1]
    assert adj.shape == (N, N, R)
    assert weight.shape == (F_in, F_out, R)
    out_dtype = x.dtype

    if tm_target is None or tk_target is None:
        d_tm, d_tk = _default_tile_targets()
        tm_target = tm_target or d_tm
        tk_target = tk_target or d_tk

    # ---- node-dim padding & tile (fixes the old tm = N fallback) ------------
    if N <= 8:
        N_p, tm = 8, 8
    elif N <= 2 * tm_target:
        N_p = _round_up(N, 16)
        tm = N_p // 2            # >= 2 node tiles so both v7x TensorCores get work
    else:
        N_p = _round_up(N, tm_target)
        tm = tm_target

    # ---- K (contraction = R*N_p) tile: multiple of 128, or full dim ---------
    K = R * N_p
    if K <= tk_target:
        tk = K
    else:
        tk = next((c for c in range(tk_target, 127, -128) if K % c == 0), K)

    # ---- F_out padding: R*F_out_p multiple of 128 -> lane-dense output ------
    fo_align = 128 // math.gcd(R, 128)
    F_out_p = _round_up(F_out, fo_align)
    RFo = R * F_out_p

    # ---- wrapper-side packing (runs once per call) ---------------------------
    # TODO(synk): keep adj / x / W in these relation-packed layouts end-to-end
    # in the surrounding model; the adj transpose is an extra HBM pass over the
    # largest tensor that no kernel-side optimization can recover.
    adj_p = jnp.pad(adj, ((0, N_p - N), (0, N_p - N), (0, 0)))
    adj_cat = jnp.transpose(adj_p, (0, 2, 1)).reshape(N_p, K).astype(compute_dtype)

    # Hoisted stage 1 + circulant permutation (depends on x/W only):
    #   xw[j, m, k, o]               = (x[..., j] @ W[..., k])[m, o]
    #   b [k*N_p + m, i*F_out_p + o] = xw[(i - k) % R, m, k, o]
    # so that out_cat = adj_cat @ b reproduces
    #   out[..., i] = sum_j adj[..., (i-j)%R] @ x[..., j] @ W[..., (i-j)%R].
    # Note: b is demoted to compute_dtype for the MXU; the xw intermediate is f32.
    x_p = jnp.pad(x, ((0, N_p - N), (0, 0), (0, 0)))
    w_p = jnp.pad(weight, ((0, 0), (0, F_out_p - F_out), (0, 0)))
    xw = jnp.einsum('nfj,fok->jnko', x_p, w_p,
                    preferred_element_type=jnp.float32)       # (R, N_p, R, F_out_p)
    rows = []
    for k in range(R):
        cols = [xw[(i - k) % R, :, k, :] for i in range(R)]   # each (N_p, F_out_p)
        rows.append(jnp.concatenate(cols, axis=1))
    b = jnp.concatenate(rows, axis=0).astype(compute_dtype)   # (K, RFo)

    # ---- VMEM budget & cost estimate ----------------------------------------
    bpe = jnp.dtype(compute_dtype).itemsize
    out_bpe = jnp.dtype(out_dtype).itemsize
    vmem_need = (2 * (tm * tk + tk * RFo) * bpe        # double-buffered inputs
                 + tm * RFo * 4                        # f32 accumulator scratch
                 + 2 * tm * RFo * out_bpe)             # double-buffered output
    vmem_limit = int(min(max(2 * vmem_need, 32 * 1024 * 1024), 56 * 1024 * 1024))

    n_node_tiles = N_p // tm
    cost = pl.CostEstimate(
        flops=2 * N_p * K * RFo,
        bytes_accessed=(N_p * K + n_node_tiles * K * RFo) * bpe + N_p * RFo * out_bpe,
        transcendentals=0,
    )

    out_cat = pl.pallas_call(
        _atgco_matmul_kernel,
        out_shape=jax.ShapeDtypeStruct((N_p, RFo), out_dtype),
        grid=(n_node_tiles, K // tk),
        in_specs=[
            pl.BlockSpec((tm, tk), lambda t, s: (t, s)),     # adj tile streams over K
            pl.BlockSpec((tk, RFo), lambda t, s: (s, 0)),    # b tiled along K (review)
        ],
        out_specs=pl.BlockSpec((tm, RFo), lambda t, s: (t, 0)),
        scratch_shapes=[pltpu.VMEM((tm, RFo), jnp.float32)],
        compiler_params=pltpu.CompilerParams(
            dimension_semantics=("parallel", "arbitrary"),
            vmem_limit_bytes=vmem_limit,
        ),
        cost_estimate=cost,
    )(adj_cat, b)

    # Unpack lane-dense slab (N_p, R*F_out_p) -> PyTorch layout (N, F_out, R).
    out = jnp.transpose(out_cat.reshape(N_p, R, F_out_p), (0, 2, 1))
    # TODO(synk): bias=True variant would add a (1, 1, F_out) bias here
    # (module default is bias=False, matching this implementation).
    return out[:N, :F_out, :]


def atgco_v1_reference(x, adj, weight):
    """Pure-JAX reference matching the PyTorch loop exactly."""
    N, F_in, R = x.shape
    outs = []
    for i in range(R):
        result = jnp.zeros((N, weight.shape[1]), dtype=jnp.float32)
        for j in range(R):
            _i = j               # index[i, j]
            _j = (i - j) % R     # circ[i, j]
            result = result + adj[..., _j] @ x[..., _i] @ weight[..., _j]
        outs.append(result)
    return jnp.stack(outs, axis=-1).astype(x.dtype)


if __name__ == "__main__":
    # Small, deterministic problem: N nodes, in/out features, R relations.
    N = 16
    in_features = 32
    out_features = 32
    num_relation = 4

    key = jax.random.PRNGKey(0)
    kx, kadj, kw = jax.random.split(key, 3)

    x = jax.random.normal(kx, (N, in_features, num_relation), dtype=jnp.float32)
    adj = jax.random.normal(kadj, (N, N, num_relation), dtype=jnp.float32)

    # Parameter init mirrors reset_parameters: uniform(-stdv, stdv),
    # stdv = 1 / sqrt(out_features). bias=False.
    stdv = 1.0 / math.sqrt(out_features)
    weight = jax.random.uniform(
        kw, (in_features, out_features, num_relation),
        minval=-stdv, maxval=stdv, dtype=jnp.float32)

    ref = atgco_v1_reference(x, adj, weight)

    # f32 MXU path: strict check against the module semantics.
    out_f32 = atgco_v1_forward(x, adj, weight, compute_dtype=jnp.float32)
    jax.block_until_ready(out_f32)
    assert out_f32.shape == (N, out_features, num_relation)
    assert jnp.allclose(out_f32, ref, atol=1e-3, rtol=1e-3), "f32 mismatch vs reference"

    # bf16 MXU path (perf default): bf16-class tolerance, f32 accumulation.
    out_bf16 = atgco_v1_forward(x, adj, weight, compute_dtype=jnp.bfloat16)
    jax.block_until_ready(out_bf16)
    assert out_bf16.shape == (N, out_features, num_relation)
    assert jnp.allclose(out_bf16, ref, atol=3e-1, rtol=5e-2), "bf16 mismatch vs reference"

    print("KERNEL_OK")
</pallas_src>

<mosaic_0001>
module attributes {stable_mosaic.version = 11 : i64} {
  func.func @_atgco_matmul_kernel(%arg0: i32, %arg1: i32, %arg2: memref<8x64xf32, #tpu.memory_space<vmem>>, %arg3: memref<64x128xf32, #tpu.memory_space<vmem>>, %arg4: memref<8x128xf32, #tpu.memory_space<vmem>>, %arg5: memref<8x128xf32, #tpu.memory_space<vmem>>) attributes {dimension_semantics = [#tpu.dimension_semantics<parallel>, #tpu.dimension_semantics<arbitrary>], iteration_bounds = array<i64: 2, 1>, scalar_prefetch = 0 : i64, scratch_operands = 1 : i64, tpu.core_type = #tpu.core_type<tc>, window_params = [{transform_indices = @transform_0, window_bounds = array<i64: 8, 64>}, {transform_indices = @transform_1, window_bounds = array<i64: 64, 128>}, {transform_indices = @transform_2, window_bounds = array<i64: 8, 128>}]} {
    %c0_i32 = arith.constant 0 : i32
    %0 = arith.cmpi eq, %arg1, %c0_i32 : i32
    %1 = arith.extui %0 : i1 to i32
    %c0_i32_0 = arith.constant 0 : i32
    %2 = arith.cmpi ne, %1, %c0_i32_0 : i32
    scf.if %2 {
      %cst_10 = arith.constant 0.000000e+00 : f32
      %12 = vector.broadcast %cst_10 : f32 to vector<8x128xf32>
      %c0_11 = arith.constant 0 : index
      %c0_12 = arith.constant 0 : index
      %13 = vector.load %arg5[%c0_11, %c0_12] : memref<8x128xf32, #tpu.memory_space<vmem>>, vector<8x128xf32>
      tpu.vector_store %arg5[%c0_11, %c0_12], %12 {strides = array<i32>} : memref<8x128xf32, #tpu.memory_space<vmem>>, vector<8x128xf32>,
    } else {
    }
    %c0 = arith.constant 0 : index
    %c0_1 = arith.constant 0 : index
    %3 = vector.load %arg5[%c0, %c0_1] : memref<8x128xf32, #tpu.memory_space<vmem>>, vector<8x128xf32>
    %c0_2 = arith.constant 0 : index
    %c0_3 = arith.constant 0 : index
    %4 = vector.load %arg2[%c0_2, %c0_3] : memref<8x64xf32, #tpu.memory_space<vmem>>, vector<8x64xf32>
    %c0_4 = arith.constant 0 : index
    %c0_5 = arith.constant 0 : index
    %5 = vector.load %arg3[%c0_4, %c0_5] : memref<64x128xf32, #tpu.memory_space<vmem>>, vector<64x128xf32>
    %cst = arith.constant dense<0.000000e+00> : vector<8x128xf32>
    %6 = tpu.matmul %4, %5, %cst {dimension_numbers = #tpu.dot_dimension_numbers<[1], [0], [0], [1], [0, 0, 1, 1], [], []>} : vector<8x64xf32>, vector<64x128xf32>, vector<8x128xf32> -> vector<8x128xf32>
    %7 = arith.addf %3, %6 : vector<8x128xf32>
    %c0_6 = arith.constant 0 : index
    %c0_7 = arith.constant 0 : index
    %8 = vector.load %arg5[%c0_6, %c0_7] : memref<8x128xf32, #tpu.memory_space<vmem>>, vector<8x128xf32>
    tpu.vector_store %arg5[%c0_6, %c0_7], %7 {strides = array<i32>} : memref<8x128xf32, #tpu.memory_space<vmem>>, vector<8x128xf32>,
    %c0_i32_8 = arith.constant 0 : i32
    %9 = arith.cmpi eq, %arg1, %c0_i32_8 : i32
    %10 = arith.extui %9 : i1 to i32
    %c0_i32_9 = arith.constant 0 : i32
    %11 = arith.cmpi ne, %10, %c0_i32_9 : i32
    scf.if %11 {
      %c0_10 = arith.constant 0 : index
      %c0_11 = arith.constant 0 : index
      %12 = vector.load %arg5[%c0_10, %c0_11] : memref<8x128xf32, #tpu.memory_space<vmem>>, vector<8x128xf32>
      %c0_12 = arith.constant 0 : index
      %c0_13 = arith.constant 0 : index
      %13 = vector.load %arg4[%c0_12, %c0_13] : memref<8x128xf32, #tpu.memory_space<vmem>>, vector<8x128xf32>
      tpu.vector_store %arg4[%c0_12, %c0_13], %12 {strides = array<i32>} : memref<8x128xf32, #tpu.memory_space<vmem>>, vector<8x128xf32>,
    } else {
    }
    return
  }
  func.func @transform_0(%arg0: i32, %arg1: i32) -> (i32, i32) {
    %c0_i32 = arith.constant 0 : i32
    return %arg0, %arg1 : i32, i32
  }
  func.func @transform_1(%arg0: i32, %arg1: i32) -> (i32, i32) {
    %c0_i32 = arith.constant 0 : i32
    %c0_i32_0 = arith.constant 0 : i32
    return %arg1, %c0_i32 : i32, i32
  }
  func.func @transform_2(%arg0: i32, %arg1: i32) -> (i32, i32) {
    %c0_i32 = arith.constant 0 : i32
    %c0_i32_0 = arith.constant 0 : i32
    return %arg0, %c0_i32 : i32, i32
  }
}

</mosaic_0001>

<llo_original>
// kernel: tpu_custom_call.1
$region0: #{tpu_custom_call.1}
  #allocation0 [shape = 'u32[]', space=smem, size = 0x4, offset = 0x4, fixed_abs, tag = 'smem constant byte address 0x4 - core index']
  #allocation1 [shape = 'u32[72,128]{1,0:T(1,128)}', space=vmem, size = 0x9000, scoped, tag = 'internal scratch']
  #allocation2 [shape = 'f32[8,128]{1,0:T(8,128)}', space=vmem, size = 0x1000, scoped, tag = 'scratch operand']
  %s0 = inlined_call_operand.hbm [shape: f32[16,64], index: 0, kind: input, shape index: {}]
  %s1 = inlined_call_operand.hbm [shape: f32[64,128], index: 1, kind: input, shape index: {}]
  %s2 = inlined_call_operand.hbm [shape: f32[16,128], index: 2, kind: output, shape index: {}]
  %s3 = sld [smem:[#allocation0]]
  $region57: #{tpu_custom_call.1} parent=0
    _
  %s5 = ssub.s32 1, %s3
  %s6 = scalar_select 0, %s5, %s3
  $region1: #{tpu_custom_call.1} parent=0
    #allocation3 [shape = 'u8[8192]{0}', space=vmem, size = 0x2000, scoped, tag = 'input window, operand 0']
    #allocation4 [shape = 's32[2]{0}', space=sflag, size = 0x8, scoped, tag = 'scoped memory for tpu_custom_call.1']
    #allocation5 [shape = 's32[2]{0}', space=sflag, size = 0x8, scoped, tag = 'scoped memory for tpu_custom_call.1']
    #allocation6 [shape = 'u8[32768]{0}', space=vmem, size = 0x8000, scoped, tag = 'input window, operand 1, single buffered']
    #allocation7 [shape = 's32[1]{0}', space=sflag, size = 0x4, scoped, tag = 'scoped memory for tpu_custom_call.1']
    #allocation8 [shape = 'u8[8192]{0}', space=vmem, size = 0x2000, scoped, tag = 'output window, operand 0']
    %7 = vsyncpa [#allocation4], 0
    %s8 = scalar_lea.sflag [#allocation4], 1
    %9 = vsyncpa %s8, 0
    %10 = vsyncpa [#allocation7], 0
    %11 = vsyncpa [#allocation5], 0
    %s12 = scalar_lea.sflag [#allocation5], 1
    %13 = vsyncpa %s12, 0
    loop: start=0, step=1, limit=4
    $region2: #{tpu_custom_call.1} parent=1 // loop_pre_header
      _
    $region3: #{tpu_custom_call.1} parent=1 // loop_header
      %s15 = sphi 0, %s19
      %p16 = scmp.ge.s32.totalorder %s15, 4
      %s22 = sphi 0, %s34
      %s23 = sphi 0, %s30
      %s24 = sphi 0, %s22
      %s25 = sphi 0, %s23
      %s26 = sphi 0, %s24
      %s27 = sphi 0, %s25
      %s39 = sphi 0, %s41
      %s42 = sphi 0, %s39
      %s43 = sphi 0, %s42
      %s59 = sphi 0, %s43
      %s65 = sphi 0, %s67
      %s68 = sphi 0, %s65
      %s69 = sphi 0, %s68
      %s85 = sphi 0, %s69
      %s91 = sphi 0, %s93
      %s94 = sphi 0, %s91
      %s95 = sphi 0, %s94
      %s111 = sphi 0, %s95
    $region4: #{tpu_custom_call.1} parent=1 // loop_header_branch
      %18 = sbr.rel (%p16) target = $region8
    $region5: #{tpu_custom_call.1} parent=1 // loop_body
      %s20 = ssub.s32 %s15, 1
      %s21 = ssub.s32 %s15, 2
      %s28 = sadd.s32 1, %s23
      %p29 = scmp.ge.s32.totalorder %s28, 1
      %s30 = scalar_select %p29, 0, %s28
      %s31 = sadd.s32 1, %s22
      %s32 = scalar_select %p29, %s31, %s22
      %p33 = scmp.ge.s32.totalorder %s32, 2
      %s34 = scalar_select %p33, 0, %s32
      %s35 = ssub.s32 %s22, %s34
      %s36 = ssub.s32 %s23, %s30
      %s37 = sor.u32 %s35, %s36
      %p38 = scmp.eq.s32.totalorder %s37, 0
      %s40 = sadd.s32 %s39, 1
      %s41 = scalar_select %p38, %s39, %s40
      %p44 = pneg %p38
      %p45 = scmp.eq.s32.totalorder %s15, 1
      %p46 = por %p44, %p45
      %p47 = scmp.ne.s32.totalorder %s39, %s42
      %p48 = scmp.eq.s32.totalorder %s15, 0
      %p49 = por %p47, %p48
      %p50 = scmp.ne.s32.totalorder %s39, %s42
      %p51 = scmp.eq.s32.totalorder %s20, 1
      %p52 = por %p50, %p51
      %p53 = scmp.ne.s32.totalorder %s42, %s43
      %p54 = scmp.eq.s32.totalorder %s20, 0
      %p55 = por %p53, %p54
      %p56 = scmp.ne.s32.totalorder %s42, %s43
      %p57 = scmp.eq.s32.totalorder %s21, 1
      %p58 = por %p56, %p57
      %p60 = scmp.ne.s32.totalorder %s43, %s59
      %p61 = scmp.eq.s32.totalorder %s21, 0
      %p62 = por %p60, %p61
      %s63 = ssub.s32 %s23, %s30
      %p64 = scmp.eq.s32.totalorder %s63, 0
      %s66 = sadd.s32 %s65, 1
      %s67 = scalar_select %p64, %s65, %s66
      %p70 = pneg %p64
      %p71 = scmp.eq.s32.totalorder %s15, 1
      %p72 = por %p70, %p71
      %p73 = scmp.ne.s32.totalorder %s65, %s68
      %p74 = scmp.eq.s32.totalorder %s15, 0
      %p75 = por %p73, %p74
      %p76 = scmp.ne.s32.totalorder %s65, %s68
      %p77 = scmp.eq.s32.totalorder %s20, 1
      %p78 = por %p76, %p77
      %p79 = scmp.ne.s32.totalorder %s68, %s69
      %p80 = scmp.eq.s32.totalorder %s20, 0
      %p81 = por %p79, %p80
      %p82 = scmp.ne.s32.totalorder %s68, %s69
      %p83 = scmp.eq.s32.totalorder %s21, 1
      %p84 = por %p82, %p83
      %p86 = scmp.ne.s32.totalorder %s69, %s85
      %p87 = scmp.eq.s32.totalorder %s21, 0
      %p88 = por %p86, %p87
      %s89 = ssub.s32 %s22, %s34
      %p90 = scmp.eq.s32.totalorder %s89, 0
      %s92 = sadd.s32 %s91, 1
      %s93 = scalar_select %p90, %s91, %s92
      %p96 = pneg %p90
      %p97 = scmp.eq.s32.totalorder %s15, 1
      %p98 = por %p96, %p97
      %p99 = scmp.ne.s32.totalorder %s91, %s94
      %p100 = scmp.eq.s32.totalorder %s15, 0
      %p101 = por %p99, %p100
      %p102 = scmp.ne.s32.totalorder %s91, %s94
      %p103 = scmp.eq.s32.totalorder %s20, 1
      %p104 = por %p102, %p103
      %p105 = scmp.ne.s32.totalorder %s94, %s95
      %p106 = scmp.eq.s32.totalorder %s20, 0
      %p107 = por %p105, %p106
      %p108 = scmp.ne.s32.totalorder %s94, %s95
      %p109 = scmp.eq.s32.totalorder %s21, 1
      %p110 = por %p108, %p109
      %p112 = scmp.ne.s32.totalorder %s95, %s111
      %p113 = scmp.eq.s32.totalorder %s21, 0
      %p114 = por %p112, %p113
      %p115 = scmp.le.s32.totalorder 1, %s15
      %p116 = scmp.lt.s32.totalorder %s15, 3
      %p117 = pnand %p115, %p116
      %p118 = pneg %p117
      // Predicated region
      $region9: #{tpu_custom_call.1} parent=5 // pred_check
        _
      $region10: #{tpu_custom_call.1} parent=5 // pred_check_branch
        %120 = sbr.rel (%p117) target = $region12
      $region11: #{tpu_custom_call.1} parent=5 // pred_region
        %s121 = ssub.s32 %s15, 1
        // Predicated region
        $region13: #{tpu_custom_call.1} parent=11 // pred_check
          %p122 = pneg %p81
        $region14: #{tpu_custom_call.1} parent=11 // pred_check_branch
          %124 = sbr.rel (%p122) target = $region16
        $region15: #{tpu_custom_call.1} parent=11 // pred_region
          %s125 = smul.u32 8, %s25
          %127 = vsyncadd [#allocation7], 0
          %s128 = smul.addr %s125, 8
          %s129 = scalar_lea.hbm %s1, %s128
          %s130 = sshll.u32 %s129, 4
          %s131 = int_to_ptr.hbm [resolvable:$true] %s130
          %s132 = sshll.u32 [#allocation6], 4
          %s133 = int_to_ptr.vmem [resolvable:$true] %s132
          %138 = dma.hbm_to_vmem [thread:$0]  %s131, 1024, %s133, [#allocation7], 128, 128, 8
        $region16: #{tpu_custom_call.1} parent=11 // pred_fallthru
          _
      $region12: #{tpu_custom_call.1} parent=5 // pred_fallthru
        _
      %p139 = scmp.lt.s32.totalorder %s15, 2
      // Predicated region
      $region17: #{tpu_custom_call.1} parent=5 // pred_check
        %p140 = pneg %p139
      $region18: #{tpu_custom_call.1} parent=5 // pred_check_branch
        %142 = sbr.rel (%p140) target = $region20
      $region19: #{tpu_custom_call.1} parent=5 // pred_region
        // Predicated region
        $region21: #{tpu_custom_call.1} parent=19 // pred_check
          %p143 = pneg %p49
        $region22: #{tpu_custom_call.1} parent=19 // pred_check_branch
          %145 = sbr.rel (%p143) target = $region24
        $region23: #{tpu_custom_call.1} parent=19 // pred_region
          %s146 = sand.u32 %s39, 1
          %s147 = scalar_lea.sflag [#allocation4], %s146
          %s148 = sand.u32 %s39, 1
          %s149 = smul.addr %s148, 8
          %s150 = scalar_lea.vmem [#allocation3], %s149
          %152 = vsyncadd %s147, 0
          %s153 = sadd.s32 %s23, %s22
          %s154 = smul.addr %s153, 8
          %s155 = scalar_lea.hbm %s0, %s154
          %s157 = sshll.u32 %s155, 4
          %s158 = int_to_ptr.hbm [resolvable:$true] %s157
          %s159 = sshll.u32 %s150, 4
          %s160 = int_to_ptr.vmem [resolvable:$true] %s159
          %162 = dma.hbm_to_vmem [thread:$0]  %s158, 128, %s160, %s147
        $region24: #{tpu_custom_call.1} parent=19 // pred_fallthru
          _
      $region20: #{tpu_custom_call.1} parent=5 // pred_fallthru
        _
      %p163 = scmp.le.s32.totalorder 1, %s15
      %p164 = scmp.lt.s32.totalorder %s15, 3
      %p165 = pnand %p163, %p164
      %p166 = pneg %p165
      // Predicated region
      $region25: #{tpu_custom_call.1} parent=5 // pred_check
        _
      $region26: #{tpu_custom_call.1} parent=5 // pred_check_branch
        %168 = sbr.rel (%p165) target = $region28
      $region27: #{tpu_custom_call.1} parent=5 // pred_region
        %s169 = ssub.s32 %s15, 1
        %s170 = sand.u32 %s42, 1
        %s171 = scalar_lea.sflag [#allocation4], %s170
        %s172 = sand.u32 %s42, 1
        %s173 = smul.addr %s172, 8
        %s174 = scalar_lea.vmem [#allocation3], %s173
        // Predicated region
        $region29: #{tpu_custom_call.1} parent=27 // pred_check
          %p175 = pneg %p55
        $region30: #{tpu_custom_call.1} parent=27 // pred_check_branch
          %177 = sbr.rel (%p175) target = $region32
        $region31: #{tpu_custom_call.1} parent=27 // pred_region
          %179 = dma.done %s171, 128
        $region32: #{tpu_custom_call.1} parent=27 // pred_fallthru
          _
        // Predicated region
        $region33: #{tpu_custom_call.1} parent=27 // pred_check
          %p180 = pneg %p81
        $region34: #{tpu_custom_call.1} parent=27 // pred_check_branch
          %182 = sbr.rel (%p180) target = $region36
        $region35: #{tpu_custom_call.1} parent=27 // pred_region
          %184 = dma.done [#allocation7], 1024
        $region36: #{tpu_custom_call.1} parent=27 // pred_fallthru
          _
        %s185 = sand.u32 %s42, 1
        %s186 = scalar_lea.sflag [#allocation4], %s185
        %s187 = sand.u32 %s42, 1
        %s188 = smul.addr %s187, 8
        %s189 = scalar_lea.vmem [#allocation3], %s188
        %p190 = pneg %p55
        %p191 = pneg %p52
        %p192 = pneg %p81
        %p193 = pneg %p78
        %p194 = pneg %p107
        %p195 = pneg %p104
        %s196 = sand.u32 %s94, 1
        %s197 = scalar_lea.sflag [#allocation5], %s196
        %s198 = sand.u32 %s94, 1
        %s199 = smul.addr %s198, 8
        %s200 = scalar_lea.vmem [#allocation8], %s199
        %s201 = smul.u32 8, %s25
        %p202 = scmp.eq.s32.totalorder %s25, 0
        // Predicated region
        $region37: #{tpu_custom_call.1} parent=27 // pred_check
          %p203 = pneg %p202
        $region38: #{tpu_custom_call.1} parent=27 // pred_check_branch
          %205 = sbr.rel (%p203) target = $region40
        $region39: #{tpu_custom_call.1} parent=27 // pred_region
          %206 = vst [vmem:[#allocation2] sm:$0xff] 0.0
        $region40: #{tpu_custom_call.1} parent=27 // pred_fallthru
          _
        %v207 = vld [vmem:[#allocation2] sm:$0xff]
        %v208 = vld [vmem:[%s174] sm:$0xff]
        %v209 = vld [vmem:[#allocation6] sm:$0xff]
        %v210 = vld [vmem:[#allocation6 + $0x8] sm:$0xff]
        %v211 = vld [vmem:[#allocation6 + $0x10] sm:$0xff]
        %v212 = vld [vmem:[#allocation6 + $0x18] sm:$0xff]
        %v213 = vld [vmem:[#allocation6 + $0x20] sm:$0xff]
        %v214 = vld [vmem:[#allocation6 + $0x28] sm:$0xff]
        %v215 = vld [vmem:[#allocation6 + $0x30] sm:$0xff]
        %v216 = vld [vmem:[#allocation6 + $0x38] sm:$0xff]
        %vm217 = vcmask 523264
        %v219 = vsel %vm217, %v208, 0
        %221 = vmatpush.msra.mxu0 0.0
        %222 = vmatpush.msra.mxu0 0.0
        %223 = vmatpush.msra.mxu0 0.0
        %224 = vmatpush.msra.mxu0 0.0
        %225 = vmatpush.msra.mxu0 0.0
        %226 = vmatpush.msra.mxu0 0.0
        %227 = vmatpush.msra.mxu0 0.0
        %228 = vmatpush.msra.mxu0 0.0
        %229 = vmatpush.msra.mxu0 %v216
        %230 = vmatpush.msra.mxu0 %v215
        %231 = vmatpush.msra.mxu0 %v214
        %232 = vmatpush.msra.mxu0 %v213
        %233 = vmatpush.msra.mxu0 %v212
        %234 = vmatpush.msra.mxu0 %v211
        %235 = vmatpush.msra.mxu0 %v210
        %236 = vmatpush.msra.mxu0 %v209
        %237 = vmatmul.f32.gmra.mxu0 %v219
        %v238 = vpop.f32.mrf.mxu0
        %v239 = vadd.f32 0.0, %v238
        %240 = vdwg.mxu0
        %v241 = vadd.f32 %v207, %v239
        %242 = vst [vmem:[#allocation2] sm:$0xff] %v241
        // Predicated region
        $region41: #{tpu_custom_call.1} parent=27 // pred_check
          %p243 = pneg %p202
        $region42: #{tpu_custom_call.1} parent=27 // pred_check_branch
          %245 = sbr.rel (%p243) target = $region44
        $region43: #{tpu_custom_call.1} parent=27 // pred_region
          %v246 = vld [vmem:[#allocation2] sm:$0xff]
          %247 = vst [vmem:[%s200] sm:$0xff] %v246
        $region44: #{tpu_custom_call.1} parent=27 // pred_fallthru
          _
        %s248 = sand.u32 %s94, 1
        %s249 = scalar_lea.sflag [#allocation5], %s248
        %s250 = sand.u32 %s94, 1
        %s251 = smul.addr %s250, 8
        %s252 = scalar_lea.vmem [#allocation8], %s251
        // Predicated region
        $region45: #{tpu_custom_call.1} parent=27 // pred_check
          %p253 = pneg %p104
        $region46: #{tpu_custom_call.1} parent=27 // pred_check_branch
          %255 = sbr.rel (%p253) target = $region48
        $region47: #{tpu_custom_call.1} parent=27 // pred_region
          %257 = vsyncadd %s249, 0
          %s258 = smul.addr %s24, 8
          %s259 = scalar_lea.hbm %s2, %s258
          %s261 = sshll.u32 %s252, 4
          %s262 = int_to_ptr.vmem [resolvable:$true] %s261
          %s263 = sshll.u32 %s259, 4
          %s264 = int_to_ptr.hbm [resolvable:$true] %s263
          %266 = dma.vmem_to_hbm [thread:$0]  %s262, 128, %s264, %s249
        $region48: #{tpu_custom_call.1} parent=27 // pred_fallthru
          _
      $region28: #{tpu_custom_call.1} parent=5 // pred_fallthru
        _
      %p267 = scmp.le.s32.totalorder 2, %s15
      // Predicated region
      $region49: #{tpu_custom_call.1} parent=5 // pred_check
        %p268 = pneg %p267
      $region50: #{tpu_custom_call.1} parent=5 // pred_check_branch
        %270 = sbr.rel (%p268) target = $region52
      $region51: #{tpu_custom_call.1} parent=5 // pred_region
        %s271 = ssub.s32 %s15, 2
        // Predicated region
        $region53: #{tpu_custom_call.1} parent=51 // pred_check
          %p272 = pneg %p110
        $region54: #{tpu_custom_call.1} parent=51 // pred_check_branch
          %274 = sbr.rel (%p272) target = $region56
        $region55: #{tpu_custom_call.1} parent=51 // pred_region
          %s275 = sand.u32 %s95, 1
          %s276 = scalar_lea.sflag [#allocation5], %s275
          %s277 = sand.u32 %s95, 1
          %s278 = smul.addr %s277, 8
          %s279 = scalar_lea.vmem [#allocation8], %s278
          %281 = dma.done %s276, 128
        $region56: #{tpu_custom_call.1} parent=51 // pred_fallthru
          _
      $region52: #{tpu_custom_call.1} parent=5 // pred_fallthru
        _
    $region6: #{tpu_custom_call.1} parent=1 // loop_footer
      %s19 = sadd.s32 1, %s15
    $region7: #{tpu_custom_call.1} parent=1 // loop_footer_branch
      %14 = sbr.rel target = $region3
    $region8: #{tpu_custom_call.1} parent=1 // loop_exit
      _
    %282 = vsyncpa [#allocation4], 1
    %s283 = scalar_lea.sflag [#allocation4], 1
    %284 = vsyncpa %s283, 1
    %285 = vsyncpa [#allocation7], 1
    %286 = vsyncpa [#allocation5], 1
    %s287 = scalar_lea.sflag [#allocation5], 1
    %288 = vsyncpa %s287, 1

</llo_original>
